<compile_context>
chip_gen: v7x
topology: tpu7x:2x2x1
jax: 0.10.0
libtpu: 0.0.40
codegen_flags: <defaults>
</compile_context>

<pallas_src>
import math

import jax
import jax.numpy as jnp
import numpy as np
from jax.experimental import pallas as pl
from jax.experimental.pallas import tpu as pltpu


def _round_up(x, m):
    return (x + m - 1) // m * m


def _vmem_capacity_bytes():
    """Per-TensorCore VMEM capacity.  Generation-aware fallback (v5e/v6e: 128 MiB,
    v7x: 64 MiB) instead of a blanket 64 MiB that would halve tile budgets."""
    try:
        info = pltpu.get_tpu_info()
        cap = int(getattr(info, "vmem_capacity_bytes", 0) or 0)
        if cap > 0:
            return cap
    except Exception:
        pass
    kind = ""
    try:
        kind = jax.devices()[0].device_kind.lower()
    except Exception:
        pass
    return 64 * 1024 * 1024 if "v7" in kind else 128 * 1024 * 1024


def _choose_tiles(N, F_pad, vmem_budget):
    """Pick (TM, TK, N_rows, N_cols): dst-row tile, src-col tile, padded node dims."""
    n8 = _round_up(N, 8)

    # dst (M) tile: whole graph if tiny; otherwise a multiple of 128 (full MXU sublane
    # occupancy), capped so there are >= 2 dst tiles (megacore 'parallel' axis on v7x).
    if n8 <= 128:
        TM = n8
    else:
        TM = min(256, _round_up(pl.cdiv(n8, 2), 128))

    # src (K) tile: decouples the A tile width from the graph size.
    if n8 <= 128:
        TK = n8
    elif n8 <= 2048:
        TK = _round_up(n8, 128)
    else:
        TK = 2048

    # Shrink if the per-step footprint (double-buffered A + T tiles, f32 out tile x2)
    # would exceed the VMEM budget.
    def footprint(tm, tk):
        return (2 * tm * tk * 2          # A tile (bf16), double-buffered
                + 2 * tk * F_pad * 2     # T tile (bf16), double-buffered
                + 2 * tm * F_pad * 4)    # out tile (f32)

    while footprint(TM, TK) > vmem_budget and TK > 128:
        TK = max(128, TK // 2)
    while footprint(TM, TK) > vmem_budget and TM > 128:
        TM = max(128, TM // 2)

    N_rows = _round_up(n8, TM)
    N_cols = _round_up(n8, TK)
    return TM, TK, N_rows, N_cols


def _rgcn_agg_kernel(a_ref, t_ref, out_ref):
    """Grid = (dst row tiles, relations, src col tiles).  The output block index is
    constant across both inner ('arbitrary') reduction axes, so it stays VMEM-resident
    and serves directly as the f32 accumulator."""
    r = pl.program_id(1)
    k = pl.program_id(2)

    @pl.when((r == 0) & (k == 0))
    def _():
        out_ref[...] = jnp.zeros_like(out_ref)

    # Aggregate this (relation, src-block)'s messages into the resident output tile:
    # (TM, TK)bf16 @ (TK, Fp)bf16 -> f32 accumulate (norm folded into A, gate into T).
    out_ref[...] += jnp.dot(a_ref[...], t_ref[...], preferred_element_type=jnp.float32)

    @pl.when((r == pl.num_programs(1) - 1) & (k == pl.num_programs(2) - 1))
    def _():
        # apply_func: activation (ReLU), applied in place on the f32 accumulator.
        out_ref[...] = jnp.maximum(out_ref[...], 0.0)


def rgcn_layer_pallas(h, weight, gate_weight, src, dst, rel, norm):
    """h: [N, F] f32; weight: [R, F, F] f32; gate_weight: [R, F, 1] f32;
    src/dst/rel: [E] int32; norm: [E, 1] f32.  Returns [N, F] f32."""
    N, F = h.shape
    R = weight.shape[0]

    F_pad = _round_up(F, 128)                       # lane-dense features
    vmem_cap = _vmem_capacity_bytes()
    TM, TK, N_rows, N_cols = _choose_tiles(N, F_pad, vmem_budget=vmem_cap // 4)
    n_dst_tiles = N_rows // TM
    n_src_tiles = N_cols // TK

    # ---- host-side (plain XLA) glue -------------------------------------------------
    # Densify the edge list into per-relation weighted adjacency A[r, dst, src]
    # (norm folded in), built at the padded size, then cast to bf16.
    # TODO(synk): for production-scale sparse graphs this O(R*N^2) dense A should be
    # replaced by a CSR / scalar-prefetch gather-scatter kernel (O(E*F) traffic), and
    # A narrowed further (int8 on v5e/v6e, fp8-e4m3 on v7x, with per-relation scales)
    # to halve the dominant HBM stream.
    A = jnp.zeros((R, N_rows, N_cols), jnp.float32)
    A = A.at[rel, dst, src].add(norm[:, 0]).astype(jnp.bfloat16)

    # Hoisted per-relation transform: computed ONCE per relation here (f32 XLA einsums,
    # O(R*N*F^2)), not once per dst row tile inside the grid.  The gate and the message
    # transform both use f32 h; only the final product is bf16-quantized.
    #   T_r = sigmoid(H @ gate_W_r) * (H @ W_r)
    hw = jnp.einsum("nf,rfk->rnk", h, weight)                          # (R, N, F)
    gate = jax.nn.sigmoid(jnp.einsum("nf,rfo->rno", h, gate_weight))   # (R, N, 1)
    t = (hw * gate).astype(jnp.bfloat16)
    t_p = jnp.zeros((R, N_cols, F_pad), jnp.bfloat16).at[:, :N, :F].set(t)

    # Explicit VMEM budget: double-buffered A / T tiles + resident f32 out tile.
    est = 2 * TM * TK * 2 + 2 * TK * F_pad * 2 + 2 * TM * F_pad * 4
    vmem_limit = int(min(0.75 * vmem_cap, max(32 * 1024 * 1024, 3 * est)))

    out_p = pl.pallas_call(
        _rgcn_agg_kernel,
        out_shape=jax.ShapeDtypeStruct((N_rows, F_pad), jnp.float32),
        grid_spec=pltpu.PrefetchScalarGridSpec(
            num_scalar_prefetch=0,
            grid=(n_dst_tiles, R, n_src_tiles),            # reductions (r, k) innermost
            in_specs=[
                # TODO(synk): if profiling shows exposed DMA on the A stream, raise its
                # buffering with pipeline_mode=pl.Buffered(3).
                pl.BlockSpec((None, TM, TK), lambda i, r, k: (r, i, k)),     # A_r tile
                pl.BlockSpec((None, TK, F_pad), lambda i, r, k: (r, k, 0)),  # T_r tile
            ],
            out_specs=pl.BlockSpec((TM, F_pad), lambda i, r, k: (i, 0)),     # resident acc
        ),
        compiler_params=pltpu.CompilerParams(
            dimension_semantics=("parallel", "arbitrary", "arbitrary"),
            vmem_limit_bytes=vmem_limit),
    )(A, t_p)

    return out_p[:N, :F]


def rgcn_layer_ref(h, weight, gate_weight, src, dst, rel, norm):
    """Pure-JAX edge-wise f32 reference mirroring the PyTorch/DGL message passing."""
    N, F = h.shape
    w_e = weight[rel]                                            # (E, F, F)
    msg = jnp.einsum("ef,efk->ek", h[src], w_e) * norm           # (E, F)
    gate = jax.nn.sigmoid(
        jnp.einsum("ef,efo->eo", h[src], gate_weight[rel]))      # (E, 1)
    msg = msg * gate
    out = jnp.zeros((N, F), jnp.float32).at[dst].add(msg)
    return jnp.maximum(out, 0.0)


def _xavier_uniform(key, shape, gain):
    # PyTorch fan convention for >2D tensors: fan_in = shape[1]*prod(shape[2:]),
    # fan_out = shape[0]*prod(shape[2:]).
    receptive = int(np.prod(shape[2:])) if len(shape) > 2 else 1
    fan_in = shape[1] * receptive
    fan_out = shape[0] * receptive
    bound = gain * math.sqrt(6.0 / (fan_in + fan_out))
    return jax.random.uniform(key, shape, jnp.float32, -bound, bound)


if __name__ == "__main__":
    key = jax.random.PRNGKey(0)
    k_h, k_w, k_gw, k_src, k_dst, k_rel, k_norm = jax.random.split(key, 7)

    N = 8          # number of nodes
    F = 32         # feat_size
    R = 4          # num_rels
    E = 24         # number of edges

    h = jax.random.normal(k_h, (N, F), jnp.float32)
    weight = _xavier_uniform(k_w, (R, F, F), gain=math.sqrt(2.0))        # relu gain
    gate_weight = _xavier_uniform(k_gw, (R, F, 1), gain=1.0)             # sigmoid gain

    src = jax.random.randint(k_src, (E,), 0, N, jnp.int32)
    dst = jax.random.randint(k_dst, (E,), 0, N, jnp.int32)
    rel = jax.random.randint(k_rel, (E,), 0, R, jnp.int32)
    norm = jax.random.uniform(k_norm, (E, 1), jnp.float32, 0.1, 1.0)

    out = rgcn_layer_pallas(h, weight, gate_weight, src, dst, rel, norm)
    out = jax.block_until_ready(out)

    ref = rgcn_layer_ref(h, weight, gate_weight, src, dst, rel, norm)
    # Tolerance reflects bf16-quantized A / T inputs (f32 accumulation in-kernel).
    np.testing.assert_allclose(np.asarray(out), np.asarray(ref), rtol=3e-2, atol=3e-2)

    print("KERNEL_OK")
</pallas_src>

<mosaic_0001>
module attributes {stable_mosaic.version = 11 : i64} {
  func.func @_rgcn_agg_kernel(%arg0: i32, %arg1: i32, %arg2: i32, %arg3: memref<1x8x8xbf16, #tpu.memory_space<vmem>>, %arg4: memref<1x8x128xbf16, #tpu.memory_space<vmem>>, %arg5: memref<8x128xf32, #tpu.memory_space<vmem>>) attributes {dimension_semantics = [#tpu.dimension_semantics<parallel>, #tpu.dimension_semantics<arbitrary>, #tpu.dimension_semantics<arbitrary>], iteration_bounds = array<i64: 1, 4, 1>, scalar_prefetch = 0 : i64, scratch_operands = 0 : i64, tpu.core_type = #tpu.core_type<tc>, window_params = [{transform_indices = @transform_0, window_bounds = array<i64: 1, 8, 8>}, {transform_indices = @transform_1, window_bounds = array<i64: 1, 8, 128>}, {transform_indices = @transform_2, window_bounds = array<i64: 8, 128>}]} {
    %c0_i32 = arith.constant 0 : i32
    %0 = arith.cmpi eq, %arg1, %c0_i32 : i32
    %c0_i32_0 = arith.constant 0 : i32
    %1 = arith.cmpi eq, %arg2, %c0_i32_0 : i32
    %2 = arith.andi %0, %1 : i1
    %3 = arith.extui %2 : i1 to i32
    %c0_i32_1 = arith.constant 0 : i32
    %4 = arith.cmpi ne, %3, %c0_i32_1 : i32
    scf.if %4 {
      %cst_13 = arith.constant 0.000000e+00 : f32
      %18 = vector.broadcast %cst_13 : f32 to vector<8x128xf32>
      %c0_14 = arith.constant 0 : index
      %c0_15 = arith.constant 0 : index
      %19 = vector.load %arg5[%c0_14, %c0_15] : memref<8x128xf32, #tpu.memory_space<vmem>>, vector<8x128xf32>
      tpu.vector_store %arg5[%c0_14, %c0_15], %18 {strides = array<i32>} : memref<8x128xf32, #tpu.memory_space<vmem>>, vector<8x128xf32>,
    } else {
    }
    %c0 = arith.constant 0 : index
    %c0_2 = arith.constant 0 : index
    %5 = vector.load %arg5[%c0, %c0_2] : memref<8x128xf32, #tpu.memory_space<vmem>>, vector<8x128xf32>
    %c0_3 = arith.constant 0 : index
    %c0_4 = arith.constant 0 : index
    %c0_5 = arith.constant 0 : index
    %6 = vector.load %arg3[%c0_3, %c0_4, %c0_5] : memref<1x8x8xbf16, #tpu.memory_space<vmem>>, vector<1x8x8xbf16>
    %7 = vector.shape_cast %6 : vector<1x8x8xbf16> to vector<8x8xbf16>
    %c0_6 = arith.constant 0 : index
    %c0_7 = arith.constant 0 : index
    %c0_8 = arith.constant 0 : index
    %8 = vector.load %arg4[%c0_6, %c0_7, %c0_8] : memref<1x8x128xbf16, #tpu.memory_space<vmem>>, vector<1x8x128xbf16>
    %9 = vector.shape_cast %8 : vector<1x8x128xbf16> to vector<8x128xbf16>
    %cst = arith.constant dense<0.000000e+00> : vector<8x128xf32>
    %10 = tpu.matmul %7, %9, %cst {dimension_numbers = #tpu.dot_dimension_numbers<[1], [0], [0], [1], [0, 0, 1, 1], [], []>} : vector<8x8xbf16>, vector<8x128xbf16>, vector<8x128xf32> -> vector<8x128xf32>
    %11 = arith.addf %5, %10 : vector<8x128xf32>
    %c0_9 = arith.constant 0 : index
    %c0_10 = arith.constant 0 : index
    %12 = vector.load %arg5[%c0_9, %c0_10] : memref<8x128xf32, #tpu.memory_space<vmem>>, vector<8x128xf32>
    tpu.vector_store %arg5[%c0_9, %c0_10], %11 {strides = array<i32>} : memref<8x128xf32, #tpu.memory_space<vmem>>, vector<8x128xf32>,
    %c3_i32 = arith.constant 3 : i32
    %13 = arith.cmpi eq, %arg1, %c3_i32 : i32
    %c0_i32_11 = arith.constant 0 : i32
    %14 = arith.cmpi eq, %arg2, %c0_i32_11 : i32
    %15 = arith.andi %13, %14 : i1
    %16 = arith.extui %15 : i1 to i32
    %c0_i32_12 = arith.constant 0 : i32
    %17 = arith.cmpi ne, %16, %c0_i32_12 : i32
    scf.if %17 {
      %c0_13 = arith.constant 0 : index
      %c0_14 = arith.constant 0 : index
      %18 = vector.load %arg5[%c0_13, %c0_14] : memref<8x128xf32, #tpu.memory_space<vmem>>, vector<8x128xf32>
      %cst_15 = arith.constant 0.000000e+00 : f32
      %19 = vector.broadcast %cst_15 : f32 to vector<8x128xf32>
      %20 = arith.maximumf %18, %19 : vector<8x128xf32>
      %c0_16 = arith.constant 0 : index
      %c0_17 = arith.constant 0 : index
      %21 = vector.load %arg5[%c0_16, %c0_17] : memref<8x128xf32, #tpu.memory_space<vmem>>, vector<8x128xf32>
      tpu.vector_store %arg5[%c0_16, %c0_17], %20 {strides = array<i32>} : memref<8x128xf32, #tpu.memory_space<vmem>>, vector<8x128xf32>,
    } else {
    }
    return
  }
  func.func @transform_0(%arg0: i32, %arg1: i32, %arg2: i32) -> (i32, i32, i32) {
    %c0_i32 = arith.constant 0 : i32
    return %arg1, %arg0, %arg2 : i32, i32, i32
  }
  func.func @transform_1(%arg0: i32, %arg1: i32, %arg2: i32) -> (i32, i32, i32) {
    %c0_i32 = arith.constant 0 : i32
    %c0_i32_0 = arith.constant 0 : i32
    return %arg1, %arg2, %c0_i32 : i32, i32, i32
  }
  func.func @transform_2(%arg0: i32, %arg1: i32, %arg2: i32) -> (i32, i32) {
    %c0_i32 = arith.constant 0 : i32
    %c0_i32_0 = arith.constant 0 : i32
    return %arg0, %c0_i32 : i32, i32
  }
}

</mosaic_0001>

<llo_original>
// kernel: tpu_custom_call.1
$region0: #{tpu_custom_call.1}
  #allocation0 [shape = 'u32[]', space=smem, size = 0x4, offset = 0x4, fixed_abs, tag = 'smem constant byte address 0x4 - core index']
  #allocation1 [shape = 'u32[144,128]{1,0:T(1,128)}', space=vmem, size = 0x12000, scoped, tag = 'internal scratch']
  %s0 = inlined_call_operand.hbm [shape: bf16[4,8,8], index: 0, kind: input, shape index: {}]
  %s1 = inlined_call_operand.hbm [shape: bf16[4,8,128], index: 1, kind: input, shape index: {}]
  %s2 = inlined_call_operand.hbm [shape: f32[8,128], index: 2, kind: output, shape index: {}]
  %s3 = sld [smem:[#allocation0]]
  $region57: #{tpu_custom_call.1} parent=0
    _
  %s5 = ssub.s32 1, %s3
  %s6 = scalar_select 0, %s5, %s3
  $region1: #{tpu_custom_call.1} parent=0
    #allocation2 [shape = 'u8[4096]{0}', space=vmem, size = 0x1000, scoped, tag = 'input window, operand 0']
    #allocation3 [shape = 's32[2]{0}', space=sflag, size = 0x8, scoped, tag = 'scoped memory for tpu_custom_call.1']
    #allocation4 [shape = 's32[2]{0}', space=sflag, size = 0x8, scoped, tag = 'scoped memory for tpu_custom_call.1']
    #allocation5 [shape = 'u8[4096]{0}', space=vmem, size = 0x1000, scoped, tag = 'input window, operand 1']
    #allocation6 [shape = 's32[2]{0}', space=sflag, size = 0x8, scoped, tag = 'scoped memory for tpu_custom_call.1']
    #allocation7 [shape = 'u8[4096]{0}', space=vmem, size = 0x1000, scoped, tag = 'output window, operand 0, single buffered']
    %7 = vsyncpa [#allocation3], 0
    %s8 = scalar_lea.sflag [#allocation3], 1
    %9 = vsyncpa %s8, 0
    %10 = vsyncpa [#allocation6], 0
    %s11 = scalar_lea.sflag [#allocation6], 1
    %12 = vsyncpa %s11, 0
    %13 = vsyncpa [#allocation4], 0
    loop: start=0, step=1, limit=6
    $region2: #{tpu_custom_call.1} parent=1 // loop_pre_header
      _
    $region3: #{tpu_custom_call.1} parent=1 // loop_header
      %s15 = sphi 0, %s19
      %p16 = scmp.ge.s32.totalorder %s15, 6
      %s22 = sphi 0, %s41
      %s23 = sphi 0, %s37
      %s24 = sphi 0, %s33
      %s25 = sphi 0, %s22
      %s26 = sphi 0, %s23
      %s27 = sphi 0, %s24
      %s28 = sphi 0, %s25
      %s29 = sphi 0, %s26
      %s30 = sphi 0, %s27
      %s48 = sphi 0, %s50
      %s51 = sphi 0, %s48
      %s52 = sphi 0, %s51
      %s68 = sphi 0, %s52
      %s76 = sphi 0, %s78
      %s79 = sphi 0, %s76
      %s80 = sphi 0, %s79
      %s96 = sphi 0, %s80
      %s102 = sphi 0, %s104
      %s105 = sphi 0, %s102
      %s106 = sphi 0, %s105
      %s122 = sphi 0, %s106
    $region4: #{tpu_custom_call.1} parent=1 // loop_header_branch
      %18 = sbr.rel (%p16) target = $region8
    $region5: #{tpu_custom_call.1} parent=1 // loop_body
      %s20 = ssub.s32 %s15, 1
      %s21 = ssub.s32 %s15, 2
      %s31 = sadd.s32 1, %s24
      %p32 = scmp.ge.s32.totalorder %s31, 1
      %s33 = scalar_select %p32, 0, %s31
      %s34 = sadd.s32 1, %s23
      %s35 = scalar_select %p32, %s34, %s23
      %p36 = scmp.ge.s32.totalorder %s35, 4
      %s37 = scalar_select %p36, 0, %s35
      %s38 = sadd.s32 1, %s22
      %s39 = scalar_select %p36, %s38, %s22
      %p40 = scmp.ge.s32.totalorder %s39, 1
      %s41 = scalar_select %p40, 0, %s39
      %s42 = ssub.s32 %s23, %s37
      %s43 = ssub.s32 %s22, %s41
      %s44 = sor.u32 %s42, %s43
      %s45 = ssub.s32 %s24, %s33
      %s46 = sor.u32 %s44, %s45
      %p47 = scmp.eq.s32.totalorder %s46, 0
      %s49 = sadd.s32 %s48, 1
      %s50 = scalar_select %p47, %s48, %s49
      %p53 = pneg %p47
      %p54 = scmp.eq.s32.totalorder %s15, 3
      %p55 = por %p53, %p54
      %p56 = scmp.ne.s32.totalorder %s48, %s51
      %p57 = scmp.eq.s32.totalorder %s15, 0
      %p58 = por %p56, %p57
      %p59 = scmp.ne.s32.totalorder %s48, %s51
      %p60 = scmp.eq.s32.totalorder %s20, 3
      %p61 = por %p59, %p60
      %p62 = scmp.ne.s32.totalorder %s51, %s52
      %p63 = scmp.eq.s32.totalorder %s20, 0
      %p64 = por %p62, %p63
      %p65 = scmp.ne.s32.totalorder %s51, %s52
      %p66 = scmp.eq.s32.totalorder %s21, 3
      %p67 = por %p65, %p66
      %p69 = scmp.ne.s32.totalorder %s52, %s68
      %p70 = scmp.eq.s32.totalorder %s21, 0
      %p71 = por %p69, %p70
      %s72 = ssub.s32 %s23, %s37
      %s73 = ssub.s32 %s24, %s33
      %s74 = sor.u32 %s72, %s73
      %p75 = scmp.eq.s32.totalorder %s74, 0
      %s77 = sadd.s32 %s76, 1
      %s78 = scalar_select %p75, %s76, %s77
      %p81 = pneg %p75
      %p82 = scmp.eq.s32.totalorder %s15, 3
      %p83 = por %p81, %p82
      %p84 = scmp.ne.s32.totalorder %s76, %s79
      %p85 = scmp.eq.s32.totalorder %s15, 0
      %p86 = por %p84, %p85
      %p87 = scmp.ne.s32.totalorder %s76, %s79
      %p88 = scmp.eq.s32.totalorder %s20, 3
      %p89 = por %p87, %p88
      %p90 = scmp.ne.s32.totalorder %s79, %s80
      %p91 = scmp.eq.s32.totalorder %s20, 0
      %p92 = por %p90, %p91
      %p93 = scmp.ne.s32.totalorder %s79, %s80
      %p94 = scmp.eq.s32.totalorder %s21, 3
      %p95 = por %p93, %p94
      %p97 = scmp.ne.s32.totalorder %s80, %s96
      %p98 = scmp.eq.s32.totalorder %s21, 0
      %p99 = por %p97, %p98
      %s100 = ssub.s32 %s22, %s41
      %p101 = scmp.eq.s32.totalorder %s100, 0
      %s103 = sadd.s32 %s102, 1
      %s104 = scalar_select %p101, %s102, %s103
      %p107 = pneg %p101
      %p108 = scmp.eq.s32.totalorder %s15, 3
      %p109 = por %p107, %p108
      %p110 = scmp.ne.s32.totalorder %s102, %s105
      %p111 = scmp.eq.s32.totalorder %s15, 0
      %p112 = por %p110, %p111
      %p113 = scmp.ne.s32.totalorder %s102, %s105
      %p114 = scmp.eq.s32.totalorder %s20, 3
      %p115 = por %p113, %p114
      %p116 = scmp.ne.s32.totalorder %s105, %s106
      %p117 = scmp.eq.s32.totalorder %s20, 0
      %p118 = por %p116, %p117
      %p119 = scmp.ne.s32.totalorder %s105, %s106
      %p120 = scmp.eq.s32.totalorder %s21, 3
      %p121 = por %p119, %p120
      %p123 = scmp.ne.s32.totalorder %s106, %s122
      %p124 = scmp.eq.s32.totalorder %s21, 0
      %p125 = por %p123, %p124
      %p126 = scmp.le.s32.totalorder 1, %s15
      %p127 = scmp.lt.s32.totalorder %s15, 5
      %p128 = pnand %p126, %p127
      %p129 = pneg %p128
      // Predicated region
      $region9: #{tpu_custom_call.1} parent=5 // pred_check
        _
      $region10: #{tpu_custom_call.1} parent=5 // pred_check_branch
        %131 = sbr.rel (%p128) target = $region12
      $region11: #{tpu_custom_call.1} parent=5 // pred_region
        %s132 = ssub.s32 %s15, 1
      $region12: #{tpu_custom_call.1} parent=5 // pred_fallthru
        _
      %p133 = scmp.lt.s32.totalorder %s15, 4
      // Predicated region
      $region13: #{tpu_custom_call.1} parent=5 // pred_check
        %p134 = pneg %p133
      $region14: #{tpu_custom_call.1} parent=5 // pred_check_branch
        %136 = sbr.rel (%p134) target = $region16
      $region15: #{tpu_custom_call.1} parent=5 // pred_region
        // Predicated region
        $region17: #{tpu_custom_call.1} parent=15 // pred_check
          %p137 = pneg %p58
        $region18: #{tpu_custom_call.1} parent=15 // pred_check_branch
          %139 = sbr.rel (%p137) target = $region20
        $region19: #{tpu_custom_call.1} parent=15 // pred_region
          %s140 = sand.u32 %s48, 1
          %s141 = scalar_lea.sflag [#allocation3], %s140
          %s142 = sand.u32 %s48, 1
          %s143 = smul.addr %s142, 4
          %s144 = scalar_lea.vmem [#allocation2], %s143
          %s146 = ssub.s32 64, 64
          %147 = vsyncadd %s141, %s146
          %s148 = sadd.s32 %s24, %s22
          %s149 = sadd.s32 %s148, %s23
          %s150 = smul.addr %s149, 64
          %s151 = scalar_lea.hbm %s0, %s150
          %s153 = sshll.u32 %s144, 4
          %s154 = int_to_ptr.vmem [resolvable:$true] %s153
          %156 = dma.hbm_to_vmem [thread:$0]  %s151, 64, %s154, %s141
        $region20: #{tpu_custom_call.1} parent=15 // pred_fallthru
          _
        // Predicated region
        $region21: #{tpu_custom_call.1} parent=15 // pred_check
          %p157 = pneg %p86
        $region22: #{tpu_custom_call.1} parent=15 // pred_check_branch
          %159 = sbr.rel (%p157) target = $region24
        $region23: #{tpu_custom_call.1} parent=15 // pred_region
          %s160 = sand.u32 %s76, 1
          %s161 = scalar_lea.sflag [#allocation6], %s160
          %s162 = sand.u32 %s76, 1
          %s163 = smul.addr %s162, 4
          %s164 = scalar_lea.vmem [#allocation5], %s163
          %s166 = ssub.s32 64, 64
          %167 = vsyncadd %s161, %s166
          %s168 = sadd.s32 %s24, %s23
          %s169 = smul.addr %s168, 64
          %s170 = scalar_lea.hbm %s1, %s169
          %s172 = sshll.u32 %s164, 4
          %s173 = int_to_ptr.vmem [resolvable:$true] %s172
          %175 = dma.hbm_to_vmem [thread:$0]  %s170, 64, %s173, %s161
        $region24: #{tpu_custom_call.1} parent=15 // pred_fallthru
          _
      $region16: #{tpu_custom_call.1} parent=5 // pred_fallthru
        _
      %p176 = scmp.le.s32.totalorder 1, %s15
      %p177 = scmp.lt.s32.totalorder %s15, 5
      %p178 = pnand %p176, %p177
      %p179 = pneg %p178
      // Predicated region
      $region25: #{tpu_custom_call.1} parent=5 // pred_check
        _
      $region26: #{tpu_custom_call.1} parent=5 // pred_check_branch
        %181 = sbr.rel (%p178) target = $region28
      $region27: #{tpu_custom_call.1} parent=5 // pred_region
        %s182 = ssub.s32 %s15, 1
        %s183 = sand.u32 %s51, 1
        %s184 = scalar_lea.sflag [#allocation3], %s183
        %s185 = sand.u32 %s51, 1
        %s186 = smul.addr %s185, 4
        %s187 = scalar_lea.vmem [#allocation2], %s186
        // Predicated region
        $region29: #{tpu_custom_call.1} parent=27 // pred_check
          %p188 = pneg %p64
        $region30: #{tpu_custom_call.1} parent=27 // pred_check_branch
          %190 = sbr.rel (%p188) target = $region32
        $region31: #{tpu_custom_call.1} parent=27 // pred_region
          %191 = dma.done %s184, 64
        $region32: #{tpu_custom_call.1} parent=27 // pred_fallthru
          _
        %s192 = sand.u32 %s79, 1
        %s193 = scalar_lea.sflag [#allocation6], %s192
        %s194 = sand.u32 %s79, 1
        %s195 = smul.addr %s194, 4
        %s196 = scalar_lea.vmem [#allocation5], %s195
        // Predicated region
        $region33: #{tpu_custom_call.1} parent=27 // pred_check
          %p197 = pneg %p92
        $region34: #{tpu_custom_call.1} parent=27 // pred_check_branch
          %199 = sbr.rel (%p197) target = $region36
        $region35: #{tpu_custom_call.1} parent=27 // pred_region
          %200 = dma.done %s193, 64
        $region36: #{tpu_custom_call.1} parent=27 // pred_fallthru
          _
        %s201 = sand.u32 %s51, 1
        %s202 = scalar_lea.sflag [#allocation3], %s201
        %s203 = sand.u32 %s51, 1
        %s204 = smul.addr %s203, 4
        %s205 = scalar_lea.vmem [#allocation2], %s204
        %p206 = pneg %p64
        %p207 = pneg %p61
        %s208 = sand.u32 %s79, 1
        %s209 = scalar_lea.sflag [#allocation6], %s208
        %s210 = sand.u32 %s79, 1
        %s211 = smul.addr %s210, 4
        %s212 = scalar_lea.vmem [#allocation5], %s211
        %p213 = pneg %p92
        %p214 = pneg %p89
        %p215 = pneg %p118
        %p216 = pneg %p115
        %p218 = scmp.eq.s32.totalorder %s26, 0
        %p219 = scmp.eq.s32.totalorder %s27, 0
        %p220 = pnand %p218, %p219
        %p221 = pneg %p220
        // Predicated region
        $region37: #{tpu_custom_call.1} parent=27 // pred_check
          _
        $region38: #{tpu_custom_call.1} parent=27 // pred_check_branch
          %223 = sbr.rel (%p220) target = $region40
        $region39: #{tpu_custom_call.1} parent=27 // pred_region
          %224 = vst [vmem:[#allocation7] sm:$0xff] 0.0
        $region40: #{tpu_custom_call.1} parent=27 // pred_fallthru
          _
        %v225 = vld [vmem:[#allocation7] sm:$0xff]
        %v226 = vld [vmem:[%s187] sm:$0xf]
        %v227 = vld [vmem:[%s196] sm:$0xf]
        %vm228 = vcmask 64512
        %v230 = vsel %vm228, %v226, 0
        %vm232 = vcmask 1043456
        %v234 = vsel %vm232, %v227, 0
        %236 = vmatprep.subr.bf16.mxu0 0
        %237 = vmatpush1.bf16.msra.mxu0 %v234
        %238 = vmatprep.subr.bf16.mxu0 0
        %239 = vmatpush1.bf16.msra.mxu0 0
        %240 = vmatprep.subr.bf16.mxu0 0
        %241 = vmatpush1.bf16.msra.mxu0 0
        %242 = vmatprep.subr.bf16.mxu0 0
        %243 = vmatpush1.bf16.msra.mxu0 0
        %244 = vmatprep.subr.bf16.mxu0 0
        %245 = vmatpush1.bf16.msra.mxu0 0
        %246 = vmatprep.subr.bf16.mxu0 0
        %247 = vmatpush1.bf16.msra.mxu0 0
        %248 = vmatprep.subr.bf16.mxu0 0
        %249 = vmatpush1.bf16.msra.mxu0 0
        %250 = vmatprep.subr.bf16.mxu0 0
        %251 = vmatpush1.bf16.msra.mxu0 0
        %252 = vmatprep.subr.bf16.mxu0 0
        %253 = vmatpush1.bf16.msra.mxu0 0
        %254 = vmatprep.subr.bf16.mxu0 0
        %255 = vmatpush1.bf16.msra.mxu0 0
        %256 = vmatprep.subr.bf16.mxu0 0
        %257 = vmatpush1.bf16.msra.mxu0 0
        %258 = vmatprep.subr.bf16.mxu0 0
        %259 = vmatpush1.bf16.msra.mxu0 0
        %260 = vmatprep.subr.bf16.mxu0 0
        %261 = vmatpush1.bf16.msra.mxu0 0
        %262 = vmatprep.subr.bf16.mxu0 0
        %263 = vmatpush1.bf16.msra.mxu0 0
        %264 = vmatprep.subr.bf16.mxu0 0
        %265 = vmatpush1.bf16.msra.mxu0 0
        %266 = vmatprep.subr.bf16.mxu0 0
        %267 = vmatpush1.bf16.msra.mxu0 0
        %268 = vmatprep.mubr.bf16.mxu0 0
        %269 = vmatmul.mubr.bf16.gmra.mrb[0].mxu0 %v230
        %v270 = vpop.f32.mrb[0].mxu0
        %v271 = vadd.f32 0.0, %v270
        %v272 = vpop.f32.mrb[0].mxu0
        %v273 = vpop.f32.mrb[0].mxu0
        %v274 = vpop.f32.mrb[0].mxu0
        %275 = vdwg.mxu0
        %v276 = vadd.f32 %v225, %v271
        %277 = vst [vmem:[#allocation7] sm:$0xff] %v276
        %p278 = scmp.eq.s32.totalorder %s26, 3
        %p279 = pnand %p278, %p219
        %p280 = pneg %p279
        // Predicated region
        $region41: #{tpu_custom_call.1} parent=27 // pred_check
          _
        $region42: #{tpu_custom_call.1} parent=27 // pred_check_branch
          %282 = sbr.rel (%p279) target = $region44
        $region43: #{tpu_custom_call.1} parent=27 // pred_region
          %v283 = vld [vmem:[#allocation7] sm:$0xff]
          %v284 = vmax.f32 %v283, 0.0
          %285 = vst [vmem:[#allocation7] sm:$0xff] %v284
        $region44: #{tpu_custom_call.1} parent=27 // pred_fallthru
          _
        // Predicated region
        $region45: #{tpu_custom_call.1} parent=27 // pred_check
          %p286 = pneg %p115
        $region46: #{tpu_custom_call.1} parent=27 // pred_check_branch
          %288 = sbr.rel (%p286) target = $region48
        $region47: #{tpu_custom_call.1} parent=27 // pred_region
          %s290 = ssub.s32 128, 128
          %291 = vsyncadd [#allocation4], %s290
          %s292 = smul.addr %s25, 128
          %s293 = scalar_lea.hbm %s2, %s292
          %s295 = sshll.u32 [#allocation7], 4
          %s296 = int_to_ptr.vmem [resolvable:$true] %s295
          %298 = dma.vmem_to_hbm [thread:$0]  %s296, 128, %s293, [#allocation4]
        $region48: #{tpu_custom_call.1} parent=27 // pred_fallthru
          _
        // Predicated region
        $region49: #{tpu_custom_call.1} parent=27 // pred_check
          %p299 = pneg %p115
        $region50: #{tpu_custom_call.1} parent=27 // pred_check_branch
          %301 = sbr.rel (%p299) target = $region52
        $region51: #{tpu_custom_call.1} parent=27 // pred_region
          %302 = dma.done [#allocation4], 128
        $region52: #{tpu_custom_call.1} parent=27 // pred_fallthru
          _
      $region28: #{tpu_custom_call.1} parent=5 // pred_fallthru
        _
      %p303 = scmp.le.s32.totalorder 2, %s15
      // Predicated region
      $region53: #{tpu_custom_call.1} parent=5 // pred_check
        %p304 = pneg %p303
      $region54: #{tpu_custom_call.1} parent=5 // pred_check_branch
        %306 = sbr.rel (%p304) target = $region56
      $region55: #{tpu_custom_call.1} parent=5 // pred_region
        %s307 = ssub.s32 %s15, 2
      $region56: #{tpu_custom_call.1} parent=5 // pred_fallthru
        _
    $region6: #{tpu_custom_call.1} parent=1 // loop_footer
      %s19 = sadd.s32 1, %s15
    $region7: #{tpu_custom_call.1} parent=1 // loop_footer_branch
      %14 = sbr.rel target = $region3
    $region8: #{tpu_custom_call.1} parent=1 // loop_exit
      _
    %308 = vsyncpa [#allocation3], 1
    %s309 = scalar_lea.sflag [#allocation3], 1
    %310 = vsyncpa %s309, 1
    %311 = vsyncpa [#allocation6], 1
    %s312 = scalar_lea.sflag [#allocation6], 1
    %313 = vsyncpa %s312, 1
    %314 = vsyncpa [#allocation4], 1
    %s315 = scalar_lea.sflag [#allocation4], 1
    %316 = vsyncpa %s315, 1

</llo_original>
